<compile_context>
chip_gen: v6e
topology: v6e:2x2x1
jax: 0.10.0
libtpu: 0.0.40
codegen_flags: <defaults>
</compile_context>

<pallas_src>
import functools

import jax
import jax.numpy as jnp
from jax.experimental import pallas as pl
from jax.experimental.pallas import tpu as pltpu


# ----------------------------- kernels --------------------------------------
def _linear_kernel_fused(x_ref, w_ref, b_ref, o_ref):
    # Fast path (K un-tiled): one MXU pass per (row, vocab) tile, bias fused,
    # single store to the lane-dense output tile. No scratch.
    o_ref[...] = (
        jnp.dot(x_ref[...], w_ref[...], preferred_element_type=jnp.float32)
        + b_ref[...]
    ).astype(o_ref.dtype)


def _linear_kernel_acc(x_ref, w_ref, b_ref, o_ref, acc_ref):
    # Tiled-K path: f32 accumulator resident across the innermost (K) axis.
    k = pl.program_id(2)

    @pl.when(k == 0)
    def _init():
        acc_ref[...] = jnp.zeros_like(acc_ref)

    acc_ref[...] += jnp.dot(
        x_ref[...], w_ref[...], preferred_element_type=jnp.float32
    )

    @pl.when(k == pl.num_programs(2) - 1)
    def _finalize():
        o_ref[...] = (acc_ref[...] + b_ref[...]).astype(o_ref.dtype)


# ----------------------------- tiling helpers --------------------------------
def _pick_tile(requested, dim, align):
    """Clamp a default tile to the problem size, keeping it (8,128)-legal."""
    if requested >= dim:
        return dim                      # full extent is always legal
    t = (requested // align) * align
    return dim if t == 0 else t


def _check_tile(name, t, dim, align):
    if t <= 0:
        raise ValueError(f"{name} must be positive, got {t}")
    if t != dim and t % align != 0:
        raise ValueError(
            f"{name}={t} must equal the full dim ({dim}) or be a multiple of {align}"
        )


def _divisor_tile(dim, target, align):
    """Largest multiple of `align` that is <= target and divides dim; else dim."""
    t = (min(target, dim) // align) * align
    while t >= align:
        if dim % t == 0:
            return t
        t -= align
    return dim


def _vmem_capacity_bytes():
    """Physical per-core VMEM; conservative (v7x-sized) fallback if unknown."""
    try:
        info = pltpu.get_tpu_info()
        cap = getattr(info, "vmem_capacity_bytes", None)
        if cap:
            return int(cap)
    except Exception:
        pass
    return 64 << 20


# ----------------------------- wrapper ---------------------------------------
@functools.partial(
    jax.jit, static_argnames=("tm", "tn", "tk", "compute_dtype", "out_dtype")
)
def project_layer(x, w_t, b, *, tm=None, tn=None, tk=None,
                  compute_dtype=None, out_dtype=None):
    """y = x @ w_t + b computed in a Pallas TPU kernel.

    x:   (batch, seq, d_model)
    w_t: (d_model, vocab_size)  -- transpose of torch Linear.weight, stored in
         the dtype you want the matmul to run in (pre-cast to bf16 once for
         production LM heads; nothing re-casts the full weight per call).
    b:   (vocab_size,)

    compute_dtype: defaults to w_t.dtype (no weight cast). Accumulation and
    bias add are always float32.
    out_dtype: defaults to x.dtype (torch semantics); pass jnp.bfloat16 to
    halve the logits write stream.
    """
    batch, seq, d_model = x.shape
    assert w_t.shape[0] == d_model and b.shape == (w_t.shape[1],)
    vocab = w_t.shape[1]
    M = batch * seq

    if compute_dtype is None:
        compute_dtype = w_t.dtype
    compute_dtype = jnp.dtype(compute_dtype)
    if out_dtype is None:
        out_dtype = x.dtype
    out_dtype = jnp.dtype(out_dtype)

    c_itemsize = compute_dtype.itemsize
    out_itemsize = out_dtype.itemsize

    # ---- generation-aware budgets -------------------------------------------
    vmem_cap = _vmem_capacity_bytes()
    small_vmem = vmem_cap <= (96 << 20)          # v7x-like (64 MiB per TC)
    vmem_budget = int(vmem_cap * 0.85)            # headroom for Mosaic scratch

    align_m = 16 if c_itemsize < 4 else 8        # bf16 packs 16 rows / vreg

    tm_auto, tn_auto, tk_auto = tm is None, tn is None, tk is None

    # ---- tile selection ------------------------------------------------------
    if tk_auto:
        untiled_k_max = 4096 if small_vmem else 8192
        if d_model <= untiled_k_max:
            tk = d_model                          # n_k == 1: W streamed once
        else:
            tk = _divisor_tile(d_model, 2048, 128)   # always divides d_model
    if tm_auto:
        tm = _pick_tile(512 if M >= 512 else 256, M, align_m)
    if tn_auto:
        tn = _pick_tile(1024 if small_vmem else 2048, vocab, 128)

    n_k = pl.cdiv(d_model, tk)

    def _footprint(tm_, tn_, tk_):
        return (
            2 * tm_ * tk_ * c_itemsize            # x double buffer
            + 2 * tk_ * tn_ * c_itemsize          # W double buffer
            + 2 * tn_ * 4                         # bias (f32) double buffer
            + 2 * tm_ * tn_ * out_itemsize        # output double buffer
            + (tm_ * tn_ * 4 if n_k > 1 else 0)   # f32 accumulator scratch
        )

    # Auto-shrink auto-picked tiles if the footprint would overflow VMEM.
    while (tn_auto and _footprint(tm, tn, tk) > vmem_budget
           and tn > 128 and tn % 256 == 0):
        tn //= 2
    while (tm_auto and _footprint(tm, tn, tk) > vmem_budget
           and tm > align_m and tm % (2 * align_m) == 0):
        tm //= 2

    _check_tile("tm", tm, M, align_m)
    _check_tile("tn", tn, vocab, 128)   # lane-dense output; never < 128 unless full
    _check_tile("tk", tk, d_model, 128)
    if n_k > 1 and d_model % tk != 0:
        raise ValueError(
            f"tk={tk} must divide d_model={d_model} when K is tiled "
            "(K-tail padding would be accumulated into valid outputs)")

    n_n = pl.cdiv(vocab, tn)
    n_m = pl.cdiv(M, tm)

    footprint = _footprint(tm, tn, tk)
    vmem_limit = int(min(max(footprint + (2 << 20), 16 << 20), vmem_budget))

    # ---- operands (only the small activation / bias are ever cast) ----------
    x2 = x.reshape(M, d_model).astype(compute_dtype)
    w_c = w_t if w_t.dtype == compute_dtype else w_t.astype(compute_dtype)
    b2 = b.reshape(1, vocab).astype(jnp.float32)

    # W is streamed once when n_k == 1 (block index constant across the row
    # axis); when K is tiled it is re-streamed once per row tile.
    w_reads = 1 if n_k == 1 else n_m
    cost = pl.CostEstimate(
        flops=2 * M * d_model * vocab,
        transcendentals=0,
        bytes_accessed=int(
            d_model * vocab * c_itemsize * w_reads
            + M * d_model * c_itemsize * n_n      # x re-read once per vocab tile
            + vocab * 4
            + M * vocab * out_itemsize
        ),
    )

    if n_k == 1:
        # ---- fast path: 2-D grid, no accumulator scratch ---------------------
        out2 = pl.pallas_call(
            _linear_kernel_fused,
            out_shape=jax.ShapeDtypeStruct((M, vocab), out_dtype),
            grid_spec=pltpu.PrefetchScalarGridSpec(
                num_scalar_prefetch=0,
                grid=(n_n, n_m),                       # vocab outer, rows inner
                in_specs=[
                    pl.BlockSpec((tm, tk), lambda j, i: (i, 0)),   # x tile
                    pl.BlockSpec((tk, tn), lambda j, i: (0, j)),   # W tile
                    pl.BlockSpec((1, tn), lambda j, i: (0, j)),    # bias tile
                ],
                out_specs=pl.BlockSpec((tm, tn), lambda j, i: (i, j)),
            ),
            compiler_params=pltpu.CompilerParams(
                dimension_semantics=("parallel", "parallel"),
                vmem_limit_bytes=vmem_limit,
            ),
            cost_estimate=cost,
        )(x2, w_c, b2)
    else:
        # ---- tiled-K path: reduction innermost, f32 accumulator --------------
        out2 = pl.pallas_call(
            _linear_kernel_acc,
            out_shape=jax.ShapeDtypeStruct((M, vocab), out_dtype),
            grid_spec=pltpu.PrefetchScalarGridSpec(
                num_scalar_prefetch=0,
                grid=(n_n, n_m, n_k),
                in_specs=[
                    pl.BlockSpec((tm, tk), lambda j, i, k: (i, k)),   # x tile
                    pl.BlockSpec((tk, tn), lambda j, i, k: (k, j)),   # W tile
                    pl.BlockSpec((1, tn), lambda j, i, k: (0, j)),    # bias tile
                ],
                out_specs=pl.BlockSpec((tm, tn), lambda j, i, k: (i, j)),
                scratch_shapes=[pltpu.VMEM((tm, tn), jnp.float32)],
            ),
            compiler_params=pltpu.CompilerParams(
                dimension_semantics=("parallel", "parallel", "arbitrary"),
                vmem_limit_bytes=vmem_limit,
            ),
            cost_estimate=cost,
        )(x2, w_c, b2)

    return out2.reshape(batch, seq, vocab)


# ----------------------------- init & reference -------------------------------
def init_project_layer_params(key, d_model, vocab_size, dtype=jnp.float32):
    """Deterministic init mirroring torch.nn.Linear defaults
    (uniform(-1/sqrt(d_model), 1/sqrt(d_model)) for weight and bias)."""
    kw, kb = jax.random.split(key)
    bound = 1.0 / jnp.sqrt(jnp.asarray(d_model, dtype))
    # Stored already transposed: (d_model, vocab_size)
    w_t = jax.random.uniform(kw, (d_model, vocab_size), dtype, -bound, bound)
    b = jax.random.uniform(kb, (vocab_size,), dtype, -bound, bound)
    return w_t, b


def _reference(x, w_t, b):
    """Same math as the kernel: operands in w_t.dtype, f32 accumulate + bias."""
    B, S, D = x.shape
    y = jnp.dot(
        x.reshape(-1, D).astype(w_t.dtype), w_t,
        preferred_element_type=jnp.float32,
    ) + b.astype(jnp.float32)
    return y.reshape(B, S, -1).astype(x.dtype)


# ----------------------------- demo / self-test -------------------------------
if __name__ == "__main__":
    key = jax.random.PRNGKey(0)
    k1, k2, k3, k4 = jax.random.split(key, 4)

    # --- Test 1: small module-consistent shape, f32 weights -------------------
    batch, seq, d_model, vocab_size = 2, 8, 32, 64
    x = jax.random.normal(k1, (batch, seq, d_model), jnp.float32)
    w_t, b = init_project_layer_params(k2, d_model, vocab_size)

    y = jax.block_until_ready(project_layer(x, w_t, b))
    assert y.shape == (batch, seq, vocab_size)
    y_f32 = x @ w_t + b                                      # torch-Linear math
    assert jnp.allclose(y, y_f32, atol=5e-2, rtol=5e-2)

    # --- Test 2: bf16 LM-head weights (pre-cast once, never re-cast per call),
    #     multi-tile grid with tiled K (accumulator path). ----------------------
    b2_, s2_, d2_, v2_ = 2, 64, 256, 512
    x_b = jax.random.normal(k3, (b2_, s2_, d2_), jnp.float32)
    w_b, bias_b = init_project_layer_params(k4, d2_, v2_)
    w_b16 = w_b.astype(jnp.bfloat16)          # stored/persisted bf16 weight

    y_acc = jax.block_until_ready(
        project_layer(x_b, w_b16, bias_b, tm=64, tn=128, tk=128)   # grid (4,2,2)
    )
    y_ref = _reference(x_b, w_b16, bias_b)
    assert y_acc.shape == (b2_, s2_, v2_)
    assert jnp.allclose(y_acc, y_ref, atol=2e-3, rtol=2e-3)

    # --- Test 3: same data, fast path (n_k == 1, no accumulator scratch) ------
    y_fast = jax.block_until_ready(
        project_layer(x_b, w_b16, bias_b, tm=32, tn=128)           # grid (4,4)
    )
    assert jnp.allclose(y_fast, y_ref, atol=2e-3, rtol=2e-3)

    print("KERNEL_OK")
</pallas_src>

<mosaic_0001>
module attributes {stable_mosaic.version = 11 : i64} {
  func.func @_linear_kernel_fused(%arg0: i32, %arg1: i32, %arg2: memref<16x32xf32, #tpu.memory_space<vmem>>, %arg3: memref<32x64xf32, #tpu.memory_space<vmem>>, %arg4: memref<1x64xf32, #tpu.memory_space<vmem>>, %arg5: memref<16x64xf32, #tpu.memory_space<vmem>>) attributes {dimension_semantics = [#tpu.dimension_semantics<parallel>, #tpu.dimension_semantics<parallel>], iteration_bounds = array<i64: 1, 1>, scalar_prefetch = 0 : i64, scratch_operands = 0 : i64, tpu.core_type = #tpu.core_type<tc>, window_params = [{transform_indices = @transform_0, window_bounds = array<i64: 16, 32>}, {transform_indices = @transform_1, window_bounds = array<i64: 32, 64>}, {transform_indices = @transform_2, window_bounds = array<i64: 1, 64>}, {transform_indices = @transform_3, window_bounds = array<i64: 16, 64>}]} {
    %c0 = arith.constant 0 : index
    %c0_0 = arith.constant 0 : index
    %0 = vector.load %arg2[%c0, %c0_0] : memref<16x32xf32, #tpu.memory_space<vmem>>, vector<16x32xf32>
    %c0_1 = arith.constant 0 : index
    %c0_2 = arith.constant 0 : index
    %1 = vector.load %arg3[%c0_1, %c0_2] : memref<32x64xf32, #tpu.memory_space<vmem>>, vector<32x64xf32>
    %cst = arith.constant dense<0.000000e+00> : vector<16x64xf32>
    %2 = tpu.matmul %0, %1, %cst {dimension_numbers = #tpu.dot_dimension_numbers<[1], [0], [0], [1], [0, 0, 1, 1], [], []>} : vector<16x32xf32>, vector<32x64xf32>, vector<16x64xf32> -> vector<16x64xf32>
    %c0_3 = arith.constant 0 : index
    %c0_4 = arith.constant 0 : index
    %3 = vector.load %arg4[%c0_3, %c0_4] : memref<1x64xf32, #tpu.memory_space<vmem>>, vector<1x64xf32>
    %4 = vector.broadcast %3 : vector<1x64xf32> to vector<16x64xf32>
    %5 = arith.addf %2, %4 : vector<16x64xf32>
    %c0_5 = arith.constant 0 : index
    %c0_6 = arith.constant 0 : index
    %6 = vector.load %arg5[%c0_5, %c0_6] : memref<16x64xf32, #tpu.memory_space<vmem>>, vector<16x64xf32>
    tpu.vector_store %arg5[%c0_5, %c0_6], %5 {strides = array<i32>} : memref<16x64xf32, #tpu.memory_space<vmem>>, vector<16x64xf32>,
    return
  }
  func.func @transform_0(%arg0: i32, %arg1: i32) -> (i32, i32) {
    %c0_i32 = arith.constant 0 : i32
    %c0_i32_0 = arith.constant 0 : i32
    return %arg1, %c0_i32 : i32, i32
  }
  func.func @transform_1(%arg0: i32, %arg1: i32) -> (i32, i32) {
    %c0_i32 = arith.constant 0 : i32
    %c0_i32_0 = arith.constant 0 : i32
    return %c0_i32, %arg0 : i32, i32
  }
  func.func @transform_2(%arg0: i32, %arg1: i32) -> (i32, i32) {
    %c0_i32 = arith.constant 0 : i32
    %c0_i32_0 = arith.constant 0 : i32
    return %c0_i32, %arg0 : i32, i32
  }
  func.func @transform_3(%arg0: i32, %arg1: i32) -> (i32, i32) {
    %c0_i32 = arith.constant 0 : i32
    return %arg1, %arg0 : i32, i32
  }
}

</mosaic_0001>

<llo_original>
// kernel: project_layer.1
$region0: #{project_layer.1}
  #allocation0 [shape = 'u32[]', space=smem, size = 0x4, offset = 0x4, fixed_abs, tag = 'smem constant byte address 0x4 - core index']
  #allocation1 [shape = 'u32[144,128]{1,0:T(1,128)}', space=vmem, size = 0x12000, scoped, tag = 'internal scratch']
  %s0 = inlined_call_operand.hbm [shape: f32[16,32], index: 0, kind: input, shape index: {}]
  %s1 = inlined_call_operand.hbm [shape: f32[32,64], index: 1, kind: input, shape index: {}]
  %s2 = inlined_call_operand.vmem [shape: f32[1,64], index: 2, kind: input, shape index: {}]
  %s3 = inlined_call_operand.hbm [shape: f32[16,64], index: 3, kind: output, shape index: {}]
  %s4 = sld [smem:[#allocation0]]
  $region30: #{project_layer.1} parent=0
    _
  %s6 = ssub.s32 1, %s4
  %s7 = scalar_select 0, %s6, %s4
  $region1: #{project_layer.1} parent=0
    #allocation2 [shape = 'u8[8192]{0}', space=vmem, size = 0x2000, scoped, tag = 'input window, operand 0, single buffered']
    #allocation3 [shape = 's32[1]{0}', space=sflag, size = 0x4, scoped, tag = 'scoped memory for project_layer.1']
    #allocation4 [shape = 's32[1]{0}', space=sflag, size = 0x4, scoped, tag = 'scoped memory for project_layer.1']
    #allocation5 [shape = 'u8[16384]{0}', space=vmem, size = 0x4000, scoped, tag = 'input window, operand 1, single buffered']
    #allocation6 [shape = 's32[1]{0}', space=sflag, size = 0x4, scoped, tag = 'scoped memory for project_layer.1']
    #allocation7 [shape = 'u8[8192]{0}', space=vmem, size = 0x2000, scoped, tag = 'output window, operand 0, single buffered']
    %8 = vsyncpa [#allocation3], 0
    %9 = vsyncpa [#allocation6], 0
    %10 = vsyncpa [#allocation4], 0
    // Predicated region
    $region2: #{project_layer.1} parent=1 // pred_check
      _
    $region3: #{project_layer.1} parent=1 // pred_check_branch
      %12 = sbr.rel (0) target = $region5
    $region4: #{project_layer.1} parent=1 // pred_region
      %s14 = ssub.s32 256, 256
      %15 = vsyncadd [#allocation3], %s14
      %s16 = sshll.u32 [#allocation2], 4
      %s17 = int_to_ptr.vmem [resolvable:$true] %s16
      %22 = dma.hbm_to_vmem [thread:$0]  %s0, 256, %s17, [#allocation3], 128, 128, 8
    $region5: #{project_layer.1} parent=1 // pred_fallthru
      _
    // Predicated region
    $region6: #{project_layer.1} parent=1 // pred_check
      _
    $region7: #{project_layer.1} parent=1 // pred_check_branch
      %24 = sbr.rel (0) target = $region9
    $region8: #{project_layer.1} parent=1 // pred_region
      %s26 = ssub.s32 512, 512
      %27 = vsyncadd [#allocation6], %s26
      %s28 = sshll.u32 [#allocation5], 4
      %s29 = int_to_ptr.vmem [resolvable:$true] %s28
      %34 = dma.hbm_to_vmem [thread:$0]  %s1, 512, %s29, [#allocation6], 128, 128, 8
    $region9: #{project_layer.1} parent=1 // pred_fallthru
      _
    // Predicated region
    $region10: #{project_layer.1} parent=1 // pred_check
      _
    $region11: #{project_layer.1} parent=1 // pred_check_branch
      %36 = sbr.rel (0) target = $region13
    $region12: #{project_layer.1} parent=1 // pred_region
      _
    $region13: #{project_layer.1} parent=1 // pred_fallthru
      _
    // Predicated region
    $region14: #{project_layer.1} parent=1 // pred_check
      _
    $region15: #{project_layer.1} parent=1 // pred_check_branch
      %38 = sbr.rel (0) target = $region17
    $region16: #{project_layer.1} parent=1 // pred_region
      %39 = dma.done [#allocation3], 256
    $region17: #{project_layer.1} parent=1 // pred_fallthru
      _
    // Predicated region
    $region18: #{project_layer.1} parent=1 // pred_check
      _
    $region19: #{project_layer.1} parent=1 // pred_check_branch
      %41 = sbr.rel (0) target = $region21
    $region20: #{project_layer.1} parent=1 // pred_region
      %42 = dma.done [#allocation6], 512
    $region21: #{project_layer.1} parent=1 // pred_fallthru
      _
    %v43 = vld [vmem:[#allocation2] sm:$0xff]
    %v44 = vld [vmem:[#allocation2 + $0x8] sm:$0xff]
    %v45 = vld [vmem:[#allocation5] sm:$0xff]
    %v46 = vld [vmem:[#allocation5 + $0x8] sm:$0xff]
    %v47 = vld [vmem:[#allocation5 + $0x10] sm:$0xff]
    %v48 = vld [vmem:[#allocation5 + $0x18] sm:$0xff]
    %v49 = vld [vmem:[%s2] sm:$0x1]
    %v51 = vlaneseq
    %v52 = vshrl.u32 %v51, 7
    %v53 = vsub.s32 0, %v52
    %v54 = vrot.slane %v49, %v53
    %vm56 = vcmask 261120
    %v58 = vsel %vm56, %v43, 0
    %v61 = vsel %vm56, %v44, 0
    %63 = vmatprep.subr.mxu0 0.0
    %64 = vmatpush1.msra.mxu0 0.0
    %65 = vmatprep.subr.mxu0 0.0
    %66 = vmatpush1.msra.mxu0 0.0
    %67 = vmatprep.subr.mxu0 0.0
    %68 = vmatpush1.msra.mxu0 0.0
    %69 = vmatprep.subr.mxu0 0.0
    %70 = vmatpush1.msra.mxu0 0.0
    %71 = vmatprep.subr.mxu0 0.0
    %72 = vmatpush1.msra.mxu0 0.0
    %73 = vmatprep.subr.mxu0 0.0
    %74 = vmatpush1.msra.mxu0 0.0
    %75 = vmatprep.subr.mxu0 0.0
    %76 = vmatpush1.msra.mxu0 0.0
    %77 = vmatprep.subr.mxu0 0.0
    %78 = vmatpush1.msra.mxu0 0.0
    %79 = vmatprep.subr.mxu0 0.0
    %80 = vmatpush1.msra.mxu0 0.0
    %81 = vmatprep.subr.mxu0 0.0
    %82 = vmatpush1.msra.mxu0 0.0
    %83 = vmatprep.subr.mxu0 0.0
    %84 = vmatpush1.msra.mxu0 0.0
    %85 = vmatprep.subr.mxu0 0.0
    %86 = vmatpush1.msra.mxu0 0.0
    %87 = vmatprep.subr.mxu0 0.0
    %88 = vmatpush1.msra.mxu0 %v48
    %89 = vmatprep.subr.mxu0 0.0
    %90 = vmatpush1.msra.mxu0 %v47
    %91 = vmatprep.subr.mxu0 0.0
    %92 = vmatpush1.msra.mxu0 %v46
    %93 = vmatprep.subr.mxu0 0.0
    %94 = vmatpush1.msra.mxu0 %v45
    %95 = vmatprep.subr.mxu0 0.0
    %96 = vmatpush2.msra.mxu0 0.0
    %97 = vmatprep.subr.mxu0 0.0
    %98 = vmatpush2.msra.mxu0 0.0
    %99 = vmatprep.subr.mxu0 0.0
    %100 = vmatpush2.msra.mxu0 0.0
    %101 = vmatprep.subr.mxu0 0.0
    %102 = vmatpush2.msra.mxu0 0.0
    %103 = vmatprep.subr.mxu0 0.0
    %104 = vmatpush2.msra.mxu0 0.0
    %105 = vmatprep.subr.mxu0 0.0
    %106 = vmatpush2.msra.mxu0 0.0
    %107 = vmatprep.subr.mxu0 0.0
    %108 = vmatpush2.msra.mxu0 0.0
    %109 = vmatprep.subr.mxu0 0.0
    %110 = vmatpush2.msra.mxu0 0.0
    %111 = vmatprep.subr.mxu0 0.0
    %112 = vmatpush2.msra.mxu0 0.0
    %113 = vmatprep.subr.mxu0 0.0
    %114 = vmatpush2.msra.mxu0 0.0
    %115 = vmatprep.subr.mxu0 0.0
    %116 = vmatpush2.msra.mxu0 0.0
    %117 = vmatprep.subr.mxu0 0.0
    %118 = vmatpush2.msra.mxu0 0.0
    %119 = vmatprep.subr.mxu0 0.0
    %120 = vmatpush2.msra.mxu0 0.0
    %121 = vmatprep.subr.mxu0 0.0
    %122 = vmatpush2.msra.mxu0 0.0
    %123 = vmatprep.subr.mxu0 0.0
    %124 = vmatpush2.msra.mxu0 0.0
    %125 = vmatprep.subr.mxu0 0.0
    %126 = vmatpush2.msra.mxu0 0.0
    %127 = vmatprep.mubr.f32.mxu0 0.0
    %128 = vmatmul.mubr.f32.gmra.mxu0 %v58
    %v129 = vpop.f32.mrf.mxu0
    %v130 = vadd.f32 %v54, %v129
    %v131 = vpop.f32.mrf.mxu0
    %132 = vmatprep.mubr.f32.mxu0 0.0
    %133 = vmatmul.mubr.f32.gmra.mxu0 %v61
    %v134 = vpop.f32.mrf.mxu0
    %v135 = vadd.f32 %v54, %v134
    %v136 = vpop.f32.mrf.mxu0
    %137 = vdwg.mxu0
    %vm138 = vcmask 523264
    %139 = vst.msk [vmem:[#allocation7] sm:$0xff] %vm138, %v130
    %140 = vst.msk [vmem:[#allocation7 + $0x8] sm:$0xff] %vm138, %v135
    // Predicated region
    $region22: #{project_layer.1} parent=1 // pred_check
      _
    $region23: #{project_layer.1} parent=1 // pred_check_branch
      %142 = sbr.rel (0) target = $region25
    $region24: #{project_layer.1} parent=1 // pred_region
      %s144 = ssub.s32 256, 256
      %145 = vsyncadd [#allocation4], %s144
      %s146 = sshll.u32 [#allocation7], 4
      %s147 = int_to_ptr.vmem [resolvable:$true] %s146
      %152 = dma.vmem_to_hbm [thread:$0]  %s147, 256, %s3, [#allocation4], 128, 128, 8
    $region25: #{project_layer.1} parent=1 // pred_fallthru
      _
    // Predicated region
    $region26: #{project_layer.1} parent=1 // pred_check
      _
    $region27: #{project_layer.1} parent=1 // pred_check_branch
      %154 = sbr.rel (0) target = $region29
    $region28: #{project_layer.1} parent=1 // pred_region
      %155 = dma.done [#allocation4], 256
    $region29: #{project_layer.1} parent=1 // pred_fallthru
      _
    %156 = vsyncpa [#allocation3], 1
    %157 = vsyncpa [#allocation6], 1
    %158 = vsyncpa [#allocation4], 1

</llo_original>
